<compile_context>
chip_gen: v7x
topology: tpu7x:2x2x1
jax: 0.10.0
libtpu: 0.0.40
codegen_flags: <defaults>
</compile_context>

<pallas_src>
import functools

import jax
import jax.numpy as jnp
from jax.experimental import pallas as pl
from jax.experimental.pallas import tpu as pltpu

_LANES = 128
_SUBLANES = 8


def _num_tensorcores():
    """Best-effort TensorCore count per device (v7x megacore -> 2), default 1."""
    try:
        info = pltpu.get_tpu_info()
        for name in ("num_cores", "core_count", "num_tensorcores",
                     "tensorcores_per_chip", "cores_per_chip"):
            v = getattr(info, name, None)
            if v:
                return int(v)
    except Exception:
        pass
    try:
        d = jax.devices()[0]
        for name in ("num_cores", "core_count"):
            v = getattr(d, name, None)
            if v:
                return int(v)
    except Exception:
        pass
    return 1


def _weighted_dice_kernel(x_ref, t_ref, inter_ref, union_ref, *,
                          pos_weight, rows_valid, rows_tile,
                          chunks_per_split, has_tail):
    s = pl.program_id(0)
    k = pl.program_id(1)

    @pl.when(k == 0)
    def _():
        inter_ref[...] = jnp.zeros_like(inter_ref)
        union_ref[...] = jnp.zeros_like(union_ref)

    b = x_ref.shape[0]
    groups = rows_tile // _SUBLANES

    def accumulate(row0):
        x = jax.nn.sigmoid(x_ref[...].astype(jnp.float32))   # (B, rows_tile, 128)
        t = t_ref[...].astype(jnp.float32)
        w = jnp.where(t == 1.0, jnp.float32(pos_weight), jnp.float32(1.0))
        xw = x * w
        inter_c = xw * t          # == x * t * w
        union_c = xw + t * w      # == x * w + t * w
        if row0 is not None:
            # Ragged tail: zero contributions of rows past the valid range.
            # where() selects the 0 branch even if the garbage rows made NaNs.
            rid = row0 + jax.lax.broadcasted_iota(jnp.int32, inter_c.shape, 1)
            valid = rid < rows_valid
            inter_c = jnp.where(valid, inter_c, 0.0)
            union_c = jnp.where(valid, union_c, 0.0)
        # Keep the sublane axis in the accumulator: reduce only over vreg
        # *groups* (pure VALU adds), not across sublanes (XLU) per chunk.
        inter_ref[0] += inter_c.reshape(b, groups, _SUBLANES, _LANES).sum(axis=1)
        union_ref[0] += union_c.reshape(b, groups, _SUBLANES, _LANES).sum(axis=1)

    if has_tail:
        row0 = (s * chunks_per_split + k) * rows_tile
        is_tail = row0 + rows_tile > rows_valid

        @pl.when(jnp.logical_not(is_tail))
        def _():
            accumulate(None)

        @pl.when(is_tail)
        def _():
            accumulate(row0)
    else:
        accumulate(None)


def weighted_dice_loss(inputs, targets, *, pos_weight=1.0, smooth=1e-6,
                       target_block_bytes=12 * 1024 * 1024):
    """inputs/targets: any shape with a leading batch dim (e.g. NCHW).

    target_block_bytes is the combined per-step footprint of the two input
    blocks (~6 MiB each when both are f32).
    """
    b = inputs.shape[0]
    x = inputs.reshape(b, -1)
    t = targets.reshape(b, -1)
    n = x.shape[1]

    # ---- lane alignment ---------------------------------------------------
    # Reshape (free for contiguous data) to lane-dense (B, rows, 128).  Only
    # when N isn't a multiple of 128 do we pad the lane dim; ragged *rows*
    # are handled in-kernel, never by padding/copying the whole tensor.
    n_lane = -(-n // _LANES) * _LANES
    if n_lane != n:
        # sigmoid(-1e30) == 0 and t == 0 => lane-pad contributes nothing.
        x = jnp.pad(x, ((0, 0), (0, n_lane - n)), constant_values=-1e30)
        t = jnp.pad(t, ((0, 0), (0, n_lane - n)), constant_values=0)
    rows = n_lane // _LANES
    x3 = x.reshape(b, rows, _LANES)
    t3 = t.reshape(b, rows, _LANES)

    # ---- tiling: (B, rows_tile, 128), rows_tile a multiple of 8 ------------
    bytes_per_row = b * _LANES * (x.dtype.itemsize + t.dtype.itemsize)
    max_rows_tile = max(
        _SUBLANES,
        (target_block_bytes // bytes_per_row) // _SUBLANES * _SUBLANES)
    rows_tile = min(max_rows_tile, -(-rows // _SUBLANES) * _SUBLANES)
    chunks = -(-rows // rows_tile)

    # Split the reduction across TensorCores only on multi-core chips (v7x
    # megacore); on 1-TC chips a split just restarts the pipeline.
    n_split = 2 if (_num_tensorcores() >= 2 and chunks >= 8) else 1
    chunks_per_split = -(-chunks // n_split)
    covered_rows = n_split * chunks_per_split * rows_tile
    has_tail = covered_rows != rows
    clamp_blocks = n_split * chunks_per_split > chunks  # fully-OOB blocks exist

    def in_map(s, k):
        blk = s * chunks_per_split + k
        if clamp_blocks:
            # Re-read the last valid chunk; the kernel's row mask zeroes it.
            blk = jnp.minimum(blk, chunks - 1)
        return (0, blk, 0)

    out_map = lambda s, k: (s, 0, 0, 0)

    kernel = functools.partial(
        _weighted_dice_kernel,
        pos_weight=float(pos_weight), rows_valid=rows, rows_tile=rows_tile,
        chunks_per_split=chunks_per_split, has_tail=has_tail)

    block_bytes = rows_tile * bytes_per_row
    vmem_limit = int(min(48 * 1024 * 1024,
                         max(32 * 1024 * 1024,
                             2 * block_bytes + 8 * 1024 * 1024)))

    inter_p, union_p = pl.pallas_call(
        kernel,
        out_shape=(
            jax.ShapeDtypeStruct((n_split, b, _SUBLANES, _LANES), jnp.float32),
            jax.ShapeDtypeStruct((n_split, b, _SUBLANES, _LANES), jnp.float32),
        ),
        grid_spec=pltpu.PrefetchScalarGridSpec(
            num_scalar_prefetch=0,
            grid=(n_split, chunks_per_split),
            in_specs=[
                pl.BlockSpec((b, rows_tile, _LANES), in_map),
                pl.BlockSpec((b, rows_tile, _LANES), in_map),
            ],
            out_specs=[
                pl.BlockSpec((1, b, _SUBLANES, _LANES), out_map),
                pl.BlockSpec((1, b, _SUBLANES, _LANES), out_map),
            ],
        ),
        compiler_params=pltpu.CompilerParams(
            dimension_semantics=("parallel", "arbitrary"),
            vmem_limit_bytes=vmem_limit),
    )(x3, t3)

    # Tiny finalize in JAX: cross-split / cross-sublane / cross-lane reduce,
    # dice, mean.
    inter = jnp.sum(inter_p, axis=(0, 2, 3))   # (B,)
    union = jnp.sum(union_p, axis=(0, 2, 3))   # (B,)
    dice = (2.0 * inter + smooth) / (union + smooth)
    return 1.0 - jnp.mean(dice)


def _reference(inputs, targets, pos_weight=1.0, smooth=1e-6):
    b = inputs.shape[0]
    x = jax.nn.sigmoid(inputs.reshape(b, -1).astype(jnp.float32))
    t = targets.reshape(b, -1).astype(jnp.float32)
    w = jnp.where(t == 1.0, pos_weight, 1.0)
    inter = jnp.sum(x * t * w, axis=1)
    union = jnp.sum(x * w + t * w, axis=1)
    dice = (2.0 * inter + smooth) / (union + smooth)
    return 1.0 - jnp.mean(dice)


if __name__ == "__main__":
    key = jax.random.PRNGKey(0)
    k1, k2, k3, k4 = jax.random.split(key, 4)
    pos_weight, smooth = 2.0, 1e-6

    # Main case: B=2, C=4, H=W=16 (lane-aligned; no masking path).
    inputs = jax.random.normal(k1, (2, 4, 16, 16), dtype=jnp.float32)
    targets = (jax.random.uniform(k2, (2, 4, 16, 16)) > 0.5).astype(jnp.float32)
    loss = jax.block_until_ready(
        weighted_dice_loss(inputs, targets, pos_weight=pos_weight, smooth=smooth))
    ref = _reference(inputs, targets, pos_weight=pos_weight, smooth=smooth)
    assert jnp.allclose(loss, ref, atol=1e-5, rtol=1e-5), (loss, ref)

    # Ragged case: rows (= N/128 = 9) not a multiple of the 8-row tile
    # exercises the in-kernel tail masking (no wrapper-side full-tensor pad).
    inputs2 = jax.random.normal(k3, (2, 9, 16, 8), dtype=jnp.float32)
    targets2 = (jax.random.uniform(k4, (2, 9, 16, 8)) > 0.5).astype(jnp.float32)
    loss2 = jax.block_until_ready(
        weighted_dice_loss(inputs2, targets2, pos_weight=pos_weight, smooth=smooth))
    ref2 = _reference(inputs2, targets2, pos_weight=pos_weight, smooth=smooth)
    assert jnp.allclose(loss2, ref2, atol=1e-5, rtol=1e-5), (loss2, ref2)

    print("KERNEL_OK")
</pallas_src>

<mosaic_0001>
module attributes {stable_mosaic.version = 11 : i64} {
  func.func @_weighted_dice_kernel(%arg0: i32, %arg1: i32, %arg2: memref<2x8x128xf32, #tpu.memory_space<vmem>>, %arg3: memref<2x8x128xf32, #tpu.memory_space<vmem>>, %arg4: memref<1x2x8x128xf32, #tpu.memory_space<vmem>>, %arg5: memref<1x2x8x128xf32, #tpu.memory_space<vmem>>) attributes {dimension_semantics = [#tpu.dimension_semantics<parallel>, #tpu.dimension_semantics<arbitrary>], iteration_bounds = array<i64: 1, 1>, scalar_prefetch = 0 : i64, scratch_operands = 0 : i64, tpu.core_type = #tpu.core_type<tc>, window_params = [{transform_indices = @transform_0, window_bounds = array<i64: 2, 8, 128>}, {transform_indices = @transform_1, window_bounds = array<i64: 2, 8, 128>}, {transform_indices = @transform_2, window_bounds = array<i64: 1, 2, 8, 128>}, {transform_indices = @transform_3, window_bounds = array<i64: 1, 2, 8, 128>}]} {
    %c0_i32 = arith.constant 0 : i32
    %0 = arith.cmpi eq, %arg1, %c0_i32 : i32
    %1 = arith.extui %0 : i1 to i32
    %c0_i32_0 = arith.constant 0 : i32
    %2 = arith.cmpi ne, %1, %c0_i32_0 : i32
    scf.if %2 {
      %cst_27 = arith.constant 0.000000e+00 : f32
      %35 = vector.broadcast %cst_27 : f32 to vector<1x2x8x128xf32>
      %c0_28 = arith.constant 0 : index
      %c0_29 = arith.constant 0 : index
      %c0_30 = arith.constant 0 : index
      %c0_31 = arith.constant 0 : index
      %36 = vector.load %arg4[%c0_28, %c0_29, %c0_30, %c0_31] : memref<1x2x8x128xf32, #tpu.memory_space<vmem>>, vector<1x2x8x128xf32>
      tpu.vector_store %arg4[%c0_28, %c0_29, %c0_30, %c0_31], %35 {strides = array<i32>} : memref<1x2x8x128xf32, #tpu.memory_space<vmem>>, vector<1x2x8x128xf32>,
      %cst_32 = arith.constant 0.000000e+00 : f32
      %37 = vector.broadcast %cst_32 : f32 to vector<1x2x8x128xf32>
      %c0_33 = arith.constant 0 : index
      %c0_34 = arith.constant 0 : index
      %c0_35 = arith.constant 0 : index
      %c0_36 = arith.constant 0 : index
      %38 = vector.load %arg5[%c0_33, %c0_34, %c0_35, %c0_36] : memref<1x2x8x128xf32, #tpu.memory_space<vmem>>, vector<1x2x8x128xf32>
      tpu.vector_store %arg5[%c0_33, %c0_34, %c0_35, %c0_36], %37 {strides = array<i32>} : memref<1x2x8x128xf32, #tpu.memory_space<vmem>>, vector<1x2x8x128xf32>,
    } else {
    }
    %c0 = arith.constant 0 : index
    %c0_1 = arith.constant 0 : index
    %c0_2 = arith.constant 0 : index
    %3 = vector.load %arg2[%c0, %c0_1, %c0_2] : memref<2x8x128xf32, #tpu.memory_space<vmem>>, vector<2x8x128xf32>
    %4 = arith.negf %3 : vector<2x8x128xf32>
    %5 = math.exp %4 : vector<2x8x128xf32>
    %cst = arith.constant 1.000000e+00 : f32
    %6 = vector.broadcast %cst : f32 to vector<2x8x128xf32>
    %7 = arith.addf %6, %5 : vector<2x8x128xf32>
    %8 = arith.divf %6, %7 : vector<2x8x128xf32>
    %c0_3 = arith.constant 0 : index
    %c0_4 = arith.constant 0 : index
    %c0_5 = arith.constant 0 : index
    %9 = vector.load %arg3[%c0_3, %c0_4, %c0_5] : memref<2x8x128xf32, #tpu.memory_space<vmem>>, vector<2x8x128xf32>
    %cst_6 = arith.constant 1.000000e+00 : f32
    %10 = vector.broadcast %cst_6 : f32 to vector<2x8x128xf32>
    %11 = arith.cmpf oeq, %9, %10 : vector<2x8x128xf32>
    %cst_7 = arith.constant 2.000000e+00 : f32
    %cst_8 = arith.constant 1.000000e+00 : f32
    %12 = vector.broadcast %cst_7 : f32 to vector<2x8x128xf32>
    %13 = vector.broadcast %cst_8 : f32 to vector<2x8x128xf32>
    %14 = arith.select %11, %12, %13 : vector<2x8x128xi1>, vector<2x8x128xf32>
    %15 = arith.mulf %8, %14 : vector<2x8x128xf32>
    %16 = arith.mulf %15, %9 : vector<2x8x128xf32>
    %17 = arith.mulf %9, %14 : vector<2x8x128xf32>
    %18 = arith.addf %15, %17 : vector<2x8x128xf32>
    %c0_9 = arith.constant 0 : index
    %c0_10 = arith.constant 0 : index
    %c0_11 = arith.constant 0 : index
    %c0_12 = arith.constant 0 : index
    %19 = vector.load %arg4[%c0_9, %c0_10, %c0_11, %c0_12] : memref<1x2x8x128xf32, #tpu.memory_space<vmem>>, vector<1x2x8x128xf32>
    %20 = vector.shape_cast %19 : vector<1x2x8x128xf32> to vector<2x8x128xf32>
    %21 = vector.shape_cast %16 : vector<2x8x128xf32> to vector<2x1x8x128xf32>
    %cst_13 = arith.constant dense<0.000000e+00> : vector<2x8x128xf32>
    %22 = vector.multi_reduction <add>, %21, %cst_13 [1] : vector<2x1x8x128xf32> to vector<2x8x128xf32>
    %23 = arith.addf %20, %22 : vector<2x8x128xf32>
    %c0_14 = arith.constant 0 : index
    %c0_15 = arith.constant 0 : index
    %c0_16 = arith.constant 0 : index
    %c0_17 = arith.constant 0 : index
    %24 = vector.load %arg4[%c0_14, %c0_15, %c0_16, %c0_17] : memref<1x2x8x128xf32, #tpu.memory_space<vmem>>, vector<1x2x8x128xf32>
    %25 = vector.shape_cast %24 : vector<1x2x8x128xf32> to vector<2x8x128xf32>
    %26 = vector.shape_cast %23 : vector<2x8x128xf32> to vector<1x2x8x128xf32>
    tpu.vector_store %arg4[%c0_14, %c0_15, %c0_16, %c0_17], %26 {strides = array<i32>} : memref<1x2x8x128xf32, #tpu.memory_space<vmem>>, vector<1x2x8x128xf32>,
    %c0_18 = arith.constant 0 : index
    %c0_19 = arith.constant 0 : index
    %c0_20 = arith.constant 0 : index
    %c0_21 = arith.constant 0 : index
    %27 = vector.load %arg5[%c0_18, %c0_19, %c0_20, %c0_21] : memref<1x2x8x128xf32, #tpu.memory_space<vmem>>, vector<1x2x8x128xf32>
    %28 = vector.shape_cast %27 : vector<1x2x8x128xf32> to vector<2x8x128xf32>
    %29 = vector.shape_cast %18 : vector<2x8x128xf32> to vector<2x1x8x128xf32>
    %cst_22 = arith.constant dense<0.000000e+00> : vector<2x8x128xf32>
    %30 = vector.multi_reduction <add>, %29, %cst_22 [1] : vector<2x1x8x128xf32> to vector<2x8x128xf32>
    %31 = arith.addf %28, %30 : vector<2x8x128xf32>
    %c0_23 = arith.constant 0 : index
    %c0_24 = arith.constant 0 : index
    %c0_25 = arith.constant 0 : index
    %c0_26 = arith.constant 0 : index
    %32 = vector.load %arg5[%c0_23, %c0_24, %c0_25, %c0_26] : memref<1x2x8x128xf32, #tpu.memory_space<vmem>>, vector<1x2x8x128xf32>
    %33 = vector.shape_cast %32 : vector<1x2x8x128xf32> to vector<2x8x128xf32>
    %34 = vector.shape_cast %31 : vector<2x8x128xf32> to vector<1x2x8x128xf32>
    tpu.vector_store %arg5[%c0_23, %c0_24, %c0_25, %c0_26], %34 {strides = array<i32>} : memref<1x2x8x128xf32, #tpu.memory_space<vmem>>, vector<1x2x8x128xf32>,
    return
  }
  func.func @transform_0(%arg0: i32, %arg1: i32) -> (i32, i32, i32) {
    %c1_i32 = arith.constant 1 : i32
    %0 = arith.muli %arg0, %c1_i32 : i32
    %1 = arith.addi %0, %arg1 : i32
    %c0_i32 = arith.constant 0 : i32
    %c0_i32_0 = arith.constant 0 : i32
    %c0_i32_1 = arith.constant 0 : i32
    return %c0_i32, %1, %c0_i32_0 : i32, i32, i32
  }
  func.func @transform_1(%arg0: i32, %arg1: i32) -> (i32, i32, i32) {
    %c1_i32 = arith.constant 1 : i32
    %0 = arith.muli %arg0, %c1_i32 : i32
    %1 = arith.addi %0, %arg1 : i32
    %c0_i32 = arith.constant 0 : i32
    %c0_i32_0 = arith.constant 0 : i32
    %c0_i32_1 = arith.constant 0 : i32
    return %c0_i32, %1, %c0_i32_0 : i32, i32, i32
  }
  func.func @transform_2(%arg0: i32, %arg1: i32) -> (i32, i32, i32, i32) {
    %c0_i32 = arith.constant 0 : i32
    %c0_i32_0 = arith.constant 0 : i32
    %c0_i32_1 = arith.constant 0 : i32
    %c0_i32_2 = arith.constant 0 : i32
    return %arg0, %c0_i32, %c0_i32_0, %c0_i32_1 : i32, i32, i32, i32
  }
  func.func @transform_3(%arg0: i32, %arg1: i32) -> (i32, i32, i32, i32) {
    %c0_i32 = arith.constant 0 : i32
    %c0_i32_0 = arith.constant 0 : i32
    %c0_i32_1 = arith.constant 0 : i32
    %c0_i32_2 = arith.constant 0 : i32
    return %arg0, %c0_i32, %c0_i32_0, %c0_i32_1 : i32, i32, i32, i32
  }
}

</mosaic_0001>

<llo_original>
// kernel: tpu_custom_call.1
$region0: #{tpu_custom_call.1}
  #allocation0 [shape = 'u32[]', space=smem, size = 0x4, offset = 0x4, fixed_abs, tag = 'smem constant byte address 0x4 - core index']
  #allocation1 [shape = 'u32[144,128]{1,0:T(1,128)}', space=vmem, size = 0x12000, scoped, tag = 'internal scratch']
  %s0 = inlined_call_operand.hbm [shape: f32[2,8,128], index: 0, kind: input, shape index: {}]
  %s1 = inlined_call_operand.hbm [shape: f32[2,8,128], index: 1, kind: input, shape index: {}]
  %s2 = inlined_call_operand.hbm [shape: f32[1,2,8,128], index: 2, kind: output, shape index: {0}]
  %s3 = inlined_call_operand.hbm [shape: f32[1,2,8,128], index: 3, kind: output, shape index: {1}]
  %4 = xla_tuple %s2, %s3
  %s5 = sld [smem:[#allocation0]]
  $region38: #{tpu_custom_call.1} parent=0
    _
  %s7 = ssub.s32 1, %s5
  %s8 = scalar_select 0, %s7, %s5
  $region1: #{tpu_custom_call.1} parent=0
    #allocation2 [shape = 'u8[8192]{0}', space=vmem, size = 0x2000, scoped, tag = 'input window, operand 0, single buffered']
    #allocation3 [shape = 's32[1]{0}', space=sflag, size = 0x4, scoped, tag = 'scoped memory for tpu_custom_call.1']
    #allocation4 [shape = 's32[1]{0}', space=sflag, size = 0x4, scoped, tag = 'scoped memory for tpu_custom_call.1']
    #allocation5 [shape = 'u8[8192]{0}', space=vmem, size = 0x2000, scoped, tag = 'input window, operand 1, single buffered']
    #allocation6 [shape = 's32[1]{0}', space=sflag, size = 0x4, scoped, tag = 'scoped memory for tpu_custom_call.1']
    #allocation7 [shape = 'u8[8192]{0}', space=vmem, size = 0x2000, scoped, tag = 'output window, operand 0, single buffered']
    #allocation8 [shape = 'u8[8192]{0}', space=vmem, size = 0x2000, scoped, tag = 'output window, operand 1, single buffered']
    #allocation9 [shape = 's32[1]{0}', space=sflag, size = 0x4, scoped, tag = 'scoped memory for tpu_custom_call.1']
    %9 = vsyncpa [#allocation3], 0
    %10 = vsyncpa [#allocation6], 0
    %11 = vsyncpa [#allocation4], 0
    %12 = vsyncpa [#allocation9], 0
    // Predicated region
    $region2: #{tpu_custom_call.1} parent=1 // pred_check
      _
    $region3: #{tpu_custom_call.1} parent=1 // pred_check_branch
      %14 = sbr.rel (0) target = $region5
    $region4: #{tpu_custom_call.1} parent=1 // pred_region
      %s15 = sadd.s32 0, 0
      %s17 = ssub.s32 256, 256
      %18 = vsyncadd [#allocation3], %s17
      %s19 = smul.addr %s15, 128
      %s20 = scalar_lea.hbm %s0, %s19
      %s21 = sshll.u32 [#allocation2], 4
      %s22 = int_to_ptr.vmem [resolvable:$true] %s21
      %27 = dma.hbm_to_vmem [thread:$0]  %s20, 256, %s22, [#allocation3], 128, 128, 8
    $region5: #{tpu_custom_call.1} parent=1 // pred_fallthru
      _
    // Predicated region
    $region6: #{tpu_custom_call.1} parent=1 // pred_check
      _
    $region7: #{tpu_custom_call.1} parent=1 // pred_check_branch
      %29 = sbr.rel (0) target = $region9
    $region8: #{tpu_custom_call.1} parent=1 // pred_region
      %s30 = sadd.s32 0, 0
      %s32 = ssub.s32 256, 256
      %33 = vsyncadd [#allocation6], %s32
      %s34 = smul.addr %s30, 128
      %s35 = scalar_lea.hbm %s1, %s34
      %s36 = sshll.u32 [#allocation5], 4
      %s37 = int_to_ptr.vmem [resolvable:$true] %s36
      %42 = dma.hbm_to_vmem [thread:$0]  %s35, 256, %s37, [#allocation6], 128, 128, 8
    $region9: #{tpu_custom_call.1} parent=1 // pred_fallthru
      _
    // Predicated region
    $region10: #{tpu_custom_call.1} parent=1 // pred_check
      _
    $region11: #{tpu_custom_call.1} parent=1 // pred_check_branch
      %44 = sbr.rel (0) target = $region13
    $region12: #{tpu_custom_call.1} parent=1 // pred_region
      %45 = dma.done [#allocation3], 256
    $region13: #{tpu_custom_call.1} parent=1 // pred_fallthru
      _
    // Predicated region
    $region14: #{tpu_custom_call.1} parent=1 // pred_check
      _
    $region15: #{tpu_custom_call.1} parent=1 // pred_check_branch
      %47 = sbr.rel (0) target = $region17
    $region16: #{tpu_custom_call.1} parent=1 // pred_region
      %48 = dma.done [#allocation6], 256
    $region17: #{tpu_custom_call.1} parent=1 // pred_fallthru
      _
    %s49 = sadd.s32 0, 0
    %s50 = sadd.s32 0, 0
    %p51 = scmp.eq.s32.totalorder 0, 0
    // Predicated region
    $region18: #{tpu_custom_call.1} parent=1 // pred_check
      %p52 = pneg %p51
    $region19: #{tpu_custom_call.1} parent=1 // pred_check_branch
      %54 = sbr.rel (%p52) target = $region21
    $region20: #{tpu_custom_call.1} parent=1 // pred_region
      %55 = vst [vmem:[#allocation7] sm:$0xff] 0.0
      %56 = vst [vmem:[#allocation7 + $0x8] sm:$0xff] 0.0
      %57 = vst [vmem:[#allocation8] sm:$0xff] 0.0
      %58 = vst [vmem:[#allocation8 + $0x8] sm:$0xff] 0.0
    $region21: #{tpu_custom_call.1} parent=1 // pred_fallthru
      _
    %v59 = vld [vmem:[#allocation2] sm:$0xff]
    %v60 = vld [vmem:[#allocation2 + $0x8] sm:$0xff]
    %v61 = vxor.u32 %v59, 2147483648
    %v62 = vxor.u32 %v60, 2147483648
    %v63 = vmul.f32 %v61, 1.442695
    %v64 = vpow.pop %v63
    %v65 = vmul.f32 %v62, 1.442695
    %v66 = vpow.pop %v65
    %v67 = vadd.f32 %v64, 1.0
    %v68 = vadd.f32 %v66, 1.0
    %v69 = vrcp.pop %v67
    %v70 = vmul.f32 1.0, %v69
    %v71 = vrcp.pop %v68
    %v72 = vmul.f32 1.0, %v71
    %v73 = vld [vmem:[#allocation5] sm:$0xff]
    %v74 = vld [vmem:[#allocation5 + $0x8] sm:$0xff]
    %vm75 = vcmp.eq.f32.partialorder %v73, 1.0
    %vm76 = vcmp.eq.f32.partialorder %v74, 1.0
    %v77 = vsel %vm75, 2.0, 1.0
    %v78 = vsel %vm76, 2.0, 1.0
    %v79 = vmul.f32 %v70, %v77
    %v80 = vmul.f32 %v72, %v78
    %v81 = vmul.f32 %v79, %v73
    %v82 = vmul.f32 %v80, %v74
    %v83 = vmul.f32 %v73, %v77
    %v84 = vmul.f32 %v74, %v78
    %v85 = vadd.f32 %v79, %v83
    %v86 = vadd.f32 %v80, %v84
    %v87 = vld [vmem:[#allocation7] sm:$0xff]
    %v88 = vld [vmem:[#allocation7 + $0x8] sm:$0xff]
    %v89 = vadd.f32 %v81, 0.0
    %v90 = vadd.f32 %v82, 0.0
    %v91 = vadd.f32 %v87, %v89
    %v92 = vadd.f32 %v88, %v90
    %93 = vst [vmem:[#allocation7] sm:$0xff] %v91
    %94 = vst [vmem:[#allocation7 + $0x8] sm:$0xff] %v92
    %v95 = vld [vmem:[#allocation8] sm:$0xff]
    %v96 = vld [vmem:[#allocation8 + $0x8] sm:$0xff]
    %v97 = vadd.f32 %v85, 0.0
    %v98 = vadd.f32 %v86, 0.0
    %v99 = vadd.f32 %v95, %v97
    %v100 = vadd.f32 %v96, %v98
    %101 = vst [vmem:[#allocation8] sm:$0xff] %v99
    %102 = vst [vmem:[#allocation8 + $0x8] sm:$0xff] %v100
    // Predicated region
    $region22: #{tpu_custom_call.1} parent=1 // pred_check
      _
    $region23: #{tpu_custom_call.1} parent=1 // pred_check_branch
      %104 = sbr.rel (0) target = $region25
    $region24: #{tpu_custom_call.1} parent=1 // pred_region
      %s106 = ssub.s32 256, 256
      %107 = vsyncadd [#allocation4], %s106
      %s108 = sshll.u32 [#allocation7], 4
      %s109 = int_to_ptr.vmem [resolvable:$true] %s108
      %114 = dma.vmem_to_hbm [thread:$0]  %s109, 256, %s2, [#allocation4], 128, 128, 8
    $region25: #{tpu_custom_call.1} parent=1 // pred_fallthru
      _
    // Predicated region
    $region26: #{tpu_custom_call.1} parent=1 // pred_check
      _
    $region27: #{tpu_custom_call.1} parent=1 // pred_check_branch
      %116 = sbr.rel (0) target = $region29
    $region28: #{tpu_custom_call.1} parent=1 // pred_region
      %s118 = ssub.s32 256, 256
      %119 = vsyncadd [#allocation9], %s118
      %s120 = sshll.u32 [#allocation8], 4
      %s121 = int_to_ptr.vmem [resolvable:$true] %s120
      %126 = dma.vmem_to_hbm [thread:$0]  %s121, 256, %s3, [#allocation9], 128, 128, 8
    $region29: #{tpu_custom_call.1} parent=1 // pred_fallthru
      _
    // Predicated region
    $region30: #{tpu_custom_call.1} parent=1 // pred_check
      _
    $region31: #{tpu_custom_call.1} parent=1 // pred_check_branch
      %128 = sbr.rel (0) target = $region33
    $region32: #{tpu_custom_call.1} parent=1 // pred_region
      %129 = dma.done [#allocation4], 256
    $region33: #{tpu_custom_call.1} parent=1 // pred_fallthru
      _
    // Predicated region
    $region34: #{tpu_custom_call.1} parent=1 // pred_check
      _
    $region35: #{tpu_custom_call.1} parent=1 // pred_check_branch
      %131 = sbr.rel (0) target = $region37
    $region36: #{tpu_custom_call.1} parent=1 // pred_region
      %132 = dma.done [#allocation9], 256
    $region37: #{tpu_custom_call.1} parent=1 // pred_fallthru
      _
    %133 = vsyncpa [#allocation3], 1
    %134 = vsyncpa [#allocation6], 1
    %135 = vsyncpa [#allocation4], 1
    %136 = vsyncpa [#allocation9], 1

</llo_original>
